<compile_context>
chip_gen: v7x
topology: tpu7x:2x2x1
jax: 0.10.0
libtpu: 0.0.40
codegen_flags: <defaults>
</compile_context>

<pallas_src>
import math

import jax
import jax.numpy as jnp
from jax import lax
from jax.experimental import pallas as pl
from jax.experimental.pallas import tpu as pltpu

# ----------------------------------------------------------------------------
# Small synthetic LLaVA-NeXT configuration (CLIP-style vision tower + LLaMA-style LM)
# ----------------------------------------------------------------------------
IMG = 16                       # vision_config.image_size
PATCH = 4                      # vision_config.patch_size
GRID = IMG // PATCH            # 4  -> 16 patches per vision tile
NTOK = GRID * GRID + 1         # 17 tokens per tile (CLS + patches)
DV = 128                       # vision hidden size
DT = 128                       # text hidden size
VH = 4                         # vision attention heads
TH = 4                         # text attention heads
HD_V = DV // VH
HD_T = DT // TH
FFN_V = 256
FFN_T = 256
N_VISION_LAYERS = 2
N_TEXT_LAYERS = 2
VOCAB = 512
IMAGE_TOKEN_INDEX = 32
GRID_PINPOINTS = [[32, 32]]    # anyres grid pinpoints -> 2x2 tiling of the base size

COMPUTE_DTYPE = jnp.bfloat16   # activations + weights; accumulation stays f32

# Tiling targets (production would use 256/512 lane tiles on v6e/v7x; the FFN target is
# kept at 128 here so the toy FFN=256 still exercises the accumulated K-tile path).
ROW_TILE_TARGET = 64
COL_TILE_TARGET = 256
FFN_TILE_TARGET = 128
ROW_PAD = 48                   # text token dim padded to a multiple of this
VMEM_LIMIT = 32 * 1024 * 1024  # explicit, safe on v5e/v6e/v7x


def _pick_tile(dim, target, quantum):
    """Largest tile <= target that is a multiple of `quantum` and divides `dim`,
    else the full dim (single block)."""
    t = (min(dim, target) // quantum) * quantum
    while t >= quantum:
        if dim % t == 0:
            return t
        t -= quantum
    return dim


def _mosaic_params(sem):
    return pltpu.CompilerParams(dimension_semantics=sem,
                                vmem_limit_bytes=VMEM_LIMIT)


def _apply_activation(y, activation):
    # y is f32 in-register; cast back to bf16 only at the next MXU operand / store.
    if activation == "quick_gelu":
        return y * jax.nn.sigmoid(1.702 * y)
    if activation == "gelu":
        return jax.nn.gelu(y, approximate=True)
    if activation == "silu":
        return jax.nn.silu(y)
    return y


def _norm_rows(x, norm, g_ref, b_ref, eps):
    if norm == "layernorm":
        xc = x - jnp.mean(x, axis=-1, keepdims=True)
        xn = xc * lax.rsqrt(jnp.mean(xc * xc, axis=-1, keepdims=True) + eps)
        return xn * g_ref[...].astype(jnp.float32) + b_ref[...].astype(jnp.float32)
    if norm == "rmsnorm":
        xn = x * lax.rsqrt(jnp.mean(x * x, axis=-1, keepdims=True) + eps)
        return xn * g_ref[...].astype(jnp.float32)
    return x


# ----------------------------------------------------------------------------
# Kernel 1: fused [norm] -> x @ W [+bias] [+act] [+RoPE on the q/k column tiles]
#           grid (B, M_tiles, N_tiles); full-K blocks; weight tiles pipeline over N.
# ----------------------------------------------------------------------------
def _make_linear_kernel(norm, has_beta, has_bias, activation,
                        has_rope, rope_tiles, rope_half, eps):
    def kernel(*refs):
        refs = list(refs)
        o_ref = refs.pop()
        x_ref = refs.pop(0)
        g_ref = b_ref = bias_ref = None
        if norm != "none":
            g_ref = refs.pop(0)
            if has_beta:
                b_ref = refs.pop(0)
        w_ref = refs.pop(0)
        if has_bias:
            bias_ref = refs.pop(0)
        if has_rope:
            cos_ref, sina_ref, sinb_ref = refs

        x = x_ref[0].astype(jnp.float32)                     # (tm, K)
        xn = _norm_rows(x, norm, g_ref, b_ref, eps)
        y = jnp.dot(xn.astype(w_ref.dtype), w_ref[...],
                    preferred_element_type=jnp.float32)      # (tm, tn)
        if has_bias:
            y = y + bias_ref[...].astype(jnp.float32)
        y = _apply_activation(y, activation)

        if has_rope:
            j = pl.program_id(2)
            tn = y.shape[-1]

            @pl.when(j < rope_tiles)                          # q and k column tiles
            def _():
                # rotate-half RoPE on the head-packed lane layout: two XLU lane rolls;
                # the "wrong-head" lanes of each roll are zeroed by the signed tables.
                roped = (y * cos_ref[...]
                         + pltpu.roll(y, tn - rope_half, axis=1) * sina_ref[...]
                         + pltpu.roll(y, rope_half, axis=1) * sinb_ref[...])
                o_ref[0] = roped.astype(o_ref.dtype)

            @pl.when(j >= rope_tiles)                         # v column tile
            def _():
                o_ref[0] = y.astype(o_ref.dtype)
        else:
            o_ref[0] = y.astype(o_ref.dtype)
    return kernel


def fused_linear(x, w, *, bias=None, gamma=None, beta=None, norm="none",
                 activation="none", rope_cos=None, rope_sin_a=None,
                 rope_sin_b=None, rope_head_dim=0, eps=1e-5):
    """y[b] = act(norm(x[b]) @ w + bias), optional fused RoPE on the q/k output tiles."""
    B, M, K = x.shape
    N = w.shape[1]
    tm = _pick_tile(M, ROW_TILE_TARGET, 8)
    tn = _pick_tile(N, COL_TILE_TARGET, 128)
    mt, nt = M // tm, N // tn

    has_rope = rope_cos is not None
    if has_rope:
        assert tn == rope_cos.shape[-1], "RoPE fusion needs N tiles == packed head width"
        rope_tiles = (2 * rope_cos.shape[-1]) // tn          # q and k tiles only
        rope_half = rope_head_dim // 2
    else:
        rope_tiles = rope_half = 0

    inputs = [x]
    in_specs = [pl.BlockSpec((1, tm, K), lambda b, i, j: (b, i, 0))]
    if norm != "none":
        inputs.append(gamma.reshape(1, K))
        in_specs.append(pl.BlockSpec((1, K), lambda b, i, j: (0, 0)))
        if beta is not None:
            inputs.append(beta.reshape(1, K))
            in_specs.append(pl.BlockSpec((1, K), lambda b, i, j: (0, 0)))
    inputs.append(w)
    in_specs.append(pl.BlockSpec((K, tn), lambda b, i, j: (0, j)))
    if bias is not None:
        inputs.append(bias.reshape(1, N))
        in_specs.append(pl.BlockSpec((1, tn), lambda b, i, j: (0, j)))
    if has_rope:
        for tbl in (rope_cos, rope_sin_a, rope_sin_b):
            inputs.append(tbl)
            in_specs.append(pl.BlockSpec((tm, tn), lambda b, i, j: (i, 0)))

    kernel = _make_linear_kernel(norm, beta is not None, bias is not None,
                                 activation, has_rope, rope_tiles, rope_half, eps)
    return pl.pallas_call(
        kernel,
        out_shape=jax.ShapeDtypeStruct((B, M, N), x.dtype),
        grid_spec=pltpu.PrefetchScalarGridSpec(
            num_scalar_prefetch=0, grid=(B, mt, nt),
            in_specs=in_specs,
            out_specs=pl.BlockSpec((1, tm, tn), lambda b, i, j: (b, i, j))),
        compiler_params=_mosaic_params(("parallel", "parallel", "parallel")),
    )(*inputs)


# ----------------------------------------------------------------------------
# Kernel 2: fused 2-layer MLP (covers CLIP MLP, projector and LLaMA gated MLP)
#   [norm] -> h = act(x@W1 + b1)   (or  silu(x@Wg) * (x@Wu) for GLU)
#          -> acc += h @ W2_tile   (F contraction tiled, f32 VMEM accumulator)
#          -> y = acc + b2 [+ residual]
# ----------------------------------------------------------------------------
def _make_mlp_kernel(norm, has_beta, glu, has_b1, has_b2, has_residual,
                     activation, eps):
    def kernel(*refs):
        refs = list(refs)
        acc_ref = refs.pop()                      # scratch (last)
        xn_ref = refs.pop()                       # scratch
        o_ref = refs.pop()                        # output
        x_ref = refs.pop(0)
        g_ref = b_ref = None
        if norm != "none":
            g_ref = refs.pop(0)
            if has_beta:
                b_ref = refs.pop(0)
        w1_ref = refs.pop(0)
        b1_ref = refs.pop(0) if has_b1 else None
        wu_ref = refs.pop(0) if glu else None
        w2_ref = refs.pop(0)
        b2_ref = refs.pop(0) if has_b2 else None
        res_ref = refs.pop(0) if has_residual else None

        f_id = pl.program_id(3)
        nf = pl.num_programs(3)

        @pl.when(f_id == 0)
        def _():
            x = x_ref[0].astype(jnp.float32)
            xn = _norm_rows(x, norm, g_ref, b_ref, eps)
            xn_ref[...] = xn.astype(xn_ref.dtype)
            acc_ref[...] = jnp.zeros_like(acc_ref)

        xn = xn_ref[...]
        h = jnp.dot(xn, w1_ref[...], preferred_element_type=jnp.float32)
        if has_b1:
            h = h + b1_ref[...].astype(jnp.float32)
        if glu:
            up = jnp.dot(xn, wu_ref[...], preferred_element_type=jnp.float32)
            h = jax.nn.silu(h) * up
        else:
            h = _apply_activation(h, activation)
        acc_ref[...] += jnp.dot(h.astype(w2_ref.dtype), w2_ref[...],
                                preferred_element_type=jnp.float32)

        @pl.when(f_id == nf - 1)
        def _():
            y = acc_ref[...]
            if has_b2:
                y = y + b2_ref[...].astype(jnp.float32)
            if has_residual:
                y = y + res_ref[0].astype(jnp.float32)
            o_ref[0] = y.astype(o_ref.dtype)
    return kernel


def fused_mlp(x, w1, w2, *, b1=None, b2=None, w_up=None, gamma=None, beta=None,
              norm="none", activation="gelu", residual=False, eps=1e-5):
    B, M, K = x.shape
    F = w1.shape[1]
    N = w2.shape[1]
    tm = _pick_tile(M, ROW_TILE_TARGET, 8)
    tf = _pick_tile(F, FFN_TILE_TARGET, 128)
    tn = _pick_tile(N, COL_TILE_TARGET, 128)
    mt, nt, ft = M // tm, N // tn, F // tf
    glu = w_up is not None

    inputs = [x]
    in_specs = [pl.BlockSpec((1, tm, K), lambda b, i, j, f: (b, i, 0))]
    if norm != "none":
        inputs.append(gamma.reshape(1, K))
        in_specs.append(pl.BlockSpec((1, K), lambda b, i, j, f: (0, 0)))
        if beta is not None:
            inputs.append(beta.reshape(1, K))
            in_specs.append(pl.BlockSpec((1, K), lambda b, i, j, f: (0, 0)))
    inputs.append(w1)
    in_specs.append(pl.BlockSpec((K, tf), lambda b, i, j, f: (0, f)))
    if b1 is not None:
        inputs.append(b1.reshape(1, F))
        in_specs.append(pl.BlockSpec((1, tf), lambda b, i, j, f: (0, f)))
    if glu:
        inputs.append(w_up)
        in_specs.append(pl.BlockSpec((K, tf), lambda b, i, j, f: (0, f)))
    inputs.append(w2)
    in_specs.append(pl.BlockSpec((tf, tn), lambda b, i, j, f: (f, j)))
    if b2 is not None:
        inputs.append(b2.reshape(1, N))
        in_specs.append(pl.BlockSpec((1, tn), lambda b, i, j, f: (0, j)))
    if residual:
        inputs.append(x)
        in_specs.append(pl.BlockSpec((1, tm, tn), lambda b, i, j, f: (b, i, j)))

    kernel = _make_mlp_kernel(norm, beta is not None, glu, b1 is not None,
                              b2 is not None, residual, activation, eps)
    return pl.pallas_call(
        kernel,
        out_shape=jax.ShapeDtypeStruct((B, M, N), x.dtype),
        grid_spec=pltpu.PrefetchScalarGridSpec(
            num_scalar_prefetch=0, grid=(B, mt, nt, ft),
            in_specs=in_specs,
            out_specs=pl.BlockSpec((1, tm, tn), lambda b, i, j, f: (b, i, j)),
            scratch_shapes=[pltpu.VMEM((tm, K), w1.dtype),        # normalized x
                            pltpu.VMEM((tm, tn), jnp.float32)]),  # f32 accumulator
        compiler_params=_mosaic_params(
            ("parallel", "parallel", "arbitrary", "arbitrary")),
    )(*inputs)


# ----------------------------------------------------------------------------
# Kernel 3: flash-style attention fused with o_proj (+bias) + residual.
#   grid (B, Q_tiles, Heads, KV_tiles); online softmax across KV tiles; the per-head
#   output is immediately contracted with Wo[h] into a per-row-tile f32 accumulator,
#   so neither the (S,S) scores nor the per-head outputs ever touch HBM.
# ----------------------------------------------------------------------------
def _make_attn_oproj_kernel(causal, has_bias, scale, tq, tk):
    def kernel(*refs):
        refs = list(refs)
        acc_o = refs.pop()
        acc_h = refs.pop()
        l_ref = refs.pop()
        m_ref = refs.pop()
        o_ref = refs.pop()
        q_ref, k_ref, v_ref, wo_ref = refs[0], refs[1], refs[2], refs[3]
        idx = 4
        ob_ref = None
        if has_bias:
            ob_ref = refs[idx]
            idx += 1
        res_ref = refs[idx]

        qi = pl.program_id(1)
        h_id = pl.program_id(2)
        kv_id = pl.program_id(3)
        nh = pl.num_programs(2)
        nkv = pl.num_programs(3)

        @pl.when(kv_id == 0)
        def _():
            m_ref[...] = jnp.full_like(m_ref, -1e30)
            l_ref[...] = jnp.zeros_like(l_ref)
            acc_h[...] = jnp.zeros_like(acc_h)

        @pl.when((h_id == 0) & (kv_id == 0))
        def _():
            acc_o[...] = jnp.zeros_like(acc_o)

        q = q_ref[0, 0]                                     # (tq, HD) bf16
        k = k_ref[0, 0]                                     # (tk, HD)
        v = v_ref[0, 0]
        # q @ k^T without materializing a transpose: contract the last dims.
        s = lax.dot_general(q, k, (((1,), (1,)), ((), ())),
                            preferred_element_type=jnp.float32) * scale
        if causal:
            row = qi * tq + lax.broadcasted_iota(jnp.int32, (tq, tk), 0)
            col = kv_id * tk + lax.broadcasted_iota(jnp.int32, (tq, tk), 1)
            s = jnp.where(row >= col, s, jnp.float32(-1e30))

        m_prev = m_ref[...]
        m_new = jnp.maximum(m_prev, jnp.max(s, axis=-1, keepdims=True))
        alpha = jnp.exp(m_prev - m_new)
        p = jnp.exp(s - m_new)
        l_ref[...] = alpha * l_ref[...] + jnp.sum(p, axis=-1, keepdims=True)
        acc_h[...] = alpha * acc_h[...] + jnp.dot(
            p.astype(v.dtype), v, preferred_element_type=jnp.float32)
        m_ref[...] = m_new

        @pl.when(kv_id == nkv - 1)
        def _():
            o_h = acc_h[...] * pl.reciprocal(l_ref[...], approx=True)   # (tq, HD)
            acc_o[...] += jnp.dot(o_h.astype(wo_ref.dtype), wo_ref[...],
                                  preferred_element_type=jnp.float32)

        @pl.when((kv_id == nkv - 1) & (h_id == nh - 1))
        def _():
            y = acc_o[...]
            if has_bias:
                y = y + ob_ref[...].astype(jnp.float32)
            y = y + res_ref[0].astype(jnp.float32)
            o_ref[0] = y.astype(o_ref.dtype)
    return kernel


def attention_oproj(q, k, v, wo, *, residual, causal, scale, bias=None):
    """q,k,v: (B, H, S, HD); returns residual + (softmax(qk^T)v) @ Wo [+ bias]."""
    B, H, S, HD = q.shape
    D = wo.shape[1]
    tq = _pick_tile(S, ROW_TILE_TARGET, 8)
    tk = _pick_tile(S, ROW_TILE_TARGET, 8)
    qt, kvt = S // tq, S // tk

    inputs = [q, k, v, wo]
    in_specs = [
        pl.BlockSpec((1, 1, tq, HD), lambda b, i, h, kv: (b, h, i, 0)),
        pl.BlockSpec((1, 1, tk, HD), lambda b, i, h, kv: (b, h, kv, 0)),
        pl.BlockSpec((1, 1, tk, HD), lambda b, i, h, kv: (b, h, kv, 0)),
        pl.BlockSpec((HD, D), lambda b, i, h, kv: (h, 0)),
    ]
    if bias is not None:
        inputs.append(bias.reshape(1, D))
        in_specs.append(pl.BlockSpec((1, D), lambda b, i, h, kv: (0, 0)))
    inputs.append(residual)
    in_specs.append(pl.BlockSpec((1, tq, D), lambda b, i, h, kv: (b, i, 0)))

    kernel = _make_attn_oproj_kernel(causal, bias is not None, scale, tq, tk)
    return pl.pallas_call(
        kernel,
        out_shape=jax.ShapeDtypeStruct((B, S, D), residual.dtype),
        grid_spec=pltpu.PrefetchScalarGridSpec(
            num_scalar_prefetch=0, grid=(B, qt, H, kvt),
            in_specs=in_specs,
            out_specs=pl.BlockSpec((1, tq, D), lambda b, i, h, kv: (b, i, 0)),
            scratch_shapes=[pltpu.VMEM((tq, 1), jnp.float32),    # m (running max)
                            pltpu.VMEM((tq, 1), jnp.float32),    # l (running denom)
                            pltpu.VMEM((tq, HD), jnp.float32),   # per-head attn acc
                            pltpu.VMEM((tq, D), jnp.float32)]),  # o_proj acc over heads
        compiler_params=_mosaic_params(
            ("parallel", "parallel", "arbitrary", "arbitrary")),
    )(*inputs)


# ----------------------------------------------------------------------------
# Kernel 4: plain norm (CLIP pre-LayerNorm, final RMSNorm)
# ----------------------------------------------------------------------------
def _make_norm_kernel(norm, has_beta, eps):
    def kernel(*refs):
        if has_beta:
            x_ref, g_ref, b_ref, o_ref = refs
        else:
            x_ref, g_ref, o_ref = refs
            b_ref = None
        x = x_ref[0].astype(jnp.float32)
        if norm == "layernorm":
            x = x - jnp.mean(x, axis=-1, keepdims=True)
        y = x * lax.rsqrt(jnp.mean(x * x, axis=-1, keepdims=True) + eps)
        y = y * g_ref[...].astype(jnp.float32)
        if has_beta:
            y = y + b_ref[...].astype(jnp.float32)
        o_ref[0] = y.astype(o_ref.dtype)
    return kernel


def norm_only(x, gamma, beta=None, *, norm="layernorm", eps=1e-5):
    B, M, D = x.shape
    tm = _pick_tile(M, ROW_TILE_TARGET, 8)
    mt = M // tm
    inputs = [x, gamma.reshape(1, D)]
    in_specs = [pl.BlockSpec((1, tm, D), lambda b, i: (b, i, 0)),
                pl.BlockSpec((1, D), lambda b, i: (0, 0))]
    if beta is not None:
        inputs.append(beta.reshape(1, D))
        in_specs.append(pl.BlockSpec((1, D), lambda b, i: (0, 0)))
    kernel = _make_norm_kernel(norm, beta is not None, eps)
    return pl.pallas_call(
        kernel,
        out_shape=jax.ShapeDtypeStruct((B, M, D), x.dtype),
        grid_spec=pltpu.PrefetchScalarGridSpec(
            num_scalar_prefetch=0, grid=(B, mt),
            in_specs=in_specs,
            out_specs=pl.BlockSpec((1, tm, D), lambda b, i: (b, i, 0))),
        compiler_params=_mosaic_params(("parallel", "parallel")),
    )(*inputs)


# ----------------------------------------------------------------------------
# Anyres helpers (exact re-implementations of the HF / vLLM python helpers)
# ----------------------------------------------------------------------------
def select_best_resolution(original_size, possible_resolutions):
    original_height, original_width = original_size
    best_fit = None
    max_effective = 0
    min_wasted = float("inf")
    for h, w in possible_resolutions:
        scale = min(w / original_width, h / original_height)
        dw, dh = int(original_width * scale), int(original_height * scale)
        effective = min(dw * dh, original_width * original_height)
        wasted = w * h - effective
        if effective > max_effective or (effective == max_effective and wasted < min_wasted):
            max_effective, min_wasted, best_fit = effective, wasted, (h, w)
    return best_fit


def get_anyres_image_grid_shape(image_size, grid_pinpoints, patch_size):
    h, w = select_best_resolution(image_size, grid_pinpoints)
    return h // patch_size, w // patch_size


def unpad_image(tensor, original_size):
    """tensor: (C, cur_h, cur_w)."""
    original_height, original_width = original_size
    current_height, current_width = tensor.shape[1:]
    original_ar = original_width / original_height
    current_ar = current_width / current_height
    if original_ar > current_ar:
        scale = current_width / original_width
        new_height = int(original_height * scale)
        padding = (current_height - new_height) // 2
        tensor = tensor[:, padding:current_height - padding]
    else:
        scale = current_height / original_height
        new_width = int(original_width * scale)
        padding = (current_width - new_width) // 2
        tensor = tensor[:, :, padding:current_width - padding]
    return tensor


def _get_num_unpadded_features(original_height, original_width, npatches,
                               num_patch_height, num_patch_width):
    current_height = npatches * num_patch_height
    current_width = npatches * num_patch_width
    original_ar = original_width / original_height
    current_ar = current_width / current_height
    if original_ar > current_ar:
        scale = current_width / original_width
        new_height = int(original_height * scale)
        padding = (current_height - new_height) // 2
        current_height -= 2 * padding
    else:
        scale = current_height / original_height
        new_width = int(original_width * scale)
        padding = (current_width - new_width) // 2
        current_width -= 2 * padding
    return current_height * current_width, current_height


def get_llava_next_image_feature_size(input_height, input_width):
    base_feature_size = NTOK - 1   # vision_feature_select_strategy='default' drops CLS
    nph, npw = get_anyres_image_grid_shape((input_height, input_width),
                                           GRID_PINPOINTS, IMG)
    unpadded, newline = _get_num_unpadded_features(input_height, input_width,
                                                   GRID, nph, npw)
    return unpadded + newline + base_feature_size


# ----------------------------------------------------------------------------
# Model pieces (all matmuls / norms / attention go through the Pallas kernels)
# ----------------------------------------------------------------------------
def clip_vision_tower(params, pixel):
    """pixel: (N, 3, IMG, IMG) NCHW -> (N, NTOK, DV) hidden states."""
    N = pixel.shape[0]
    pixel = pixel.astype(COMPUTE_DTYPE)
    # patchify: rows flattened (c, kh, kw), patches in row-major grid order
    x = pixel.reshape(N, 3, GRID, PATCH, GRID, PATCH)
    x = jnp.transpose(x, (0, 2, 4, 1, 3, 5)).reshape(N, GRID * GRID, 3 * PATCH * PATCH)
    x = fused_linear(x, params["patch_w"], bias=params["patch_b"])   # conv-as-matmul
    cls = jnp.broadcast_to(params["cls"][None, None, :], (N, 1, DV)).astype(x.dtype)
    x = jnp.concatenate([cls, x], axis=1)                            # (N, NTOK, DV)
    x = x + params["pos_emb"][None].astype(x.dtype)
    h = norm_only(x, params["pre_ln_g"], params["pre_ln_b"],
                  norm="layernorm", eps=1e-5)

    scale = 1.0 / math.sqrt(HD_V)
    for lp in params["vision_layers"]:
        # fused LayerNorm + QKV projection (tiled over N)
        qkv = fused_linear(h, lp["qkv_w"], bias=lp["qkv_b"],
                           gamma=lp["ln1_g"], beta=lp["ln1_b"],
                           norm="layernorm", eps=1e-5)
        q = qkv[:, :, :DV].reshape(N, NTOK, VH, HD_V).transpose(0, 2, 1, 3)
        k = qkv[:, :, DV:2 * DV].reshape(N, NTOK, VH, HD_V).transpose(0, 2, 1, 3)
        v = qkv[:, :, 2 * DV:].reshape(N, NTOK, VH, HD_V).transpose(0, 2, 1, 3)
        # flash attention fused with out-projection + bias + residual
        h = attention_oproj(q, k, v, lp["o_w"], bias=lp["o_b"],
                            residual=h, causal=False, scale=scale)
        # fused LayerNorm + fc1(quick_gelu) + fc2 + residual (F-tiled accumulator)
        h = fused_mlp(h, lp["fc1_w"], lp["fc2_w"], b1=lp["fc1_b"], b2=lp["fc2_b"],
                      gamma=lp["ln2_g"], beta=lp["ln2_b"], norm="layernorm",
                      activation="quick_gelu", residual=True, eps=1e-5)
    return h                                                           # (N, NTOK, DV)


def multi_modal_projector(params, x):
    """x: (tiles, patches, DV) -> (tiles, patches, DT): linear -> GELU -> linear."""
    return fused_mlp(x, params["proj_l1_w"], params["proj_l2_w"],
                     b1=params["proj_l1_b"], b2=params["proj_l2_b"],
                     norm="none", activation="gelu", residual=False)


def merge_image_patch_embeddings(image_size, patch_embeds, image_newline):
    """strategy='spatial_unpad'. patch_embeds: (num_tiles, GRID*GRID, DT)."""
    height = width = GRID
    base = patch_embeds[0]                                       # (16, DT)
    orig_h, orig_w = int(image_size[0]), int(image_size[1])
    if patch_embeds.shape[0] > 1:
        nph, npw = get_anyres_image_grid_shape((orig_h, orig_w), GRID_PINPOINTS, IMG)
        num_patches = nph * npw
        other = patch_embeds[1:1 + num_patches].reshape(nph, npw, height, width, -1)
        other = jnp.transpose(other, (4, 0, 2, 1, 3))            # (C, nph, h, npw, w)
        other = other.reshape(other.shape[0], nph * height, npw * width)
        other = unpad_image(other, (orig_h, orig_w))             # (C, ch, cw)
        C, ch, cw = other.shape
        nl = jnp.broadcast_to(image_newline[:, None, None], (C, ch, 1)).astype(other.dtype)
        other = jnp.concatenate([other, nl], axis=-1)            # (C, ch, cw+1)
        other = other.reshape(C, ch * (cw + 1)).T                # (ch*(cw+1), C)
        return jnp.concatenate([base, other], axis=0)
    return jnp.concatenate([base, image_newline[None].astype(base.dtype)], axis=0)


def merge_multimodal_embeddings(input_ids, inputs_embeds, vision_embeddings,
                                image_token_id):
    vis = jnp.concatenate(list(vision_embeddings), axis=0)
    mask = input_ids == image_token_id
    idx = jnp.clip(jnp.cumsum(mask.astype(jnp.int32)) - 1, 0, vis.shape[0] - 1)
    return jnp.where(mask[:, None], vis[idx], inputs_embeds)


def language_model_forward(params, inputs_embeds, positions):
    """LLaMA-style decoder: fused RMSNorm+QKV(+RoPE) -> flash causal MHA fused with
       o_proj+residual -> fused RMSNorm + gated MLP + residual."""
    T, D = inputs_embeds.shape
    Tp = ((T + ROW_PAD - 1) // ROW_PAD) * ROW_PAD
    pad = Tp - T
    # pad the token dimension ONCE (causal masking keeps pad keys out of real rows)
    x = jnp.pad(inputs_embeds, ((0, pad), (0, 0)))
    pos_p = jnp.pad(positions, (0, pad))

    # RoPE tables computed ONCE per forward, laid out over the head-packed 128 lanes
    # with the rotate-half sign baked in (consumed by the QKV-projection epilogue).
    half = HD_T // 2
    inv_freq = 1.0 / (10000.0 ** (jnp.arange(half, dtype=jnp.float32) / half))
    freqs = pos_p.astype(jnp.float32)[:, None] * inv_freq[None, :]   # (Tp, half)
    cos, sin = jnp.cos(freqs), jnp.sin(freqs)
    zeros = jnp.zeros_like(sin)
    rope_cos = jnp.tile(jnp.concatenate([cos, cos], axis=-1), (1, TH))       # (Tp, DT)
    rope_sin_a = jnp.tile(jnp.concatenate([-sin, zeros], axis=-1), (1, TH))  # first half
    rope_sin_b = jnp.tile(jnp.concatenate([zeros, sin], axis=-1), (1, TH))   # second half

    x3 = x[None]                                                     # (1, Tp, DT)
    scale = 1.0 / math.sqrt(HD_T)
    for lp in params["text_layers"]:
        qkv = fused_linear(x3, lp["qkv_w"], gamma=lp["ln1_g"], norm="rmsnorm",
                           eps=1e-6, rope_cos=rope_cos, rope_sin_a=rope_sin_a,
                           rope_sin_b=rope_sin_b, rope_head_dim=HD_T)
        q = qkv[0, :, :DT].reshape(Tp, TH, HD_T).transpose(1, 0, 2)[None]
        k = qkv[0, :, DT:2 * DT].reshape(Tp, TH, HD_T).transpose(1, 0, 2)[None]
        v = qkv[0, :, 2 * DT:].reshape(Tp, TH, HD_T).transpose(1, 0, 2)[None]
        x3 = attention_oproj(q, k, v, lp["o_w"], residual=x3,
                             causal=True, scale=scale)
        x3 = fused_mlp(x3, lp["gate_w"], lp["down_w"], w_up=lp["up_w"],
                       gamma=lp["ln2_g"], norm="rmsnorm", residual=True, eps=1e-6)
    x3 = norm_only(x3, params["final_norm_g"], norm="rmsnorm", eps=1e-6)
    return x3[0, :T]


def llava_next_forward(params, input_ids, positions, pixel_values, image_sizes):
    """Equivalent of LlavaNextForConditionalGeneration.forward (prefill path)."""
    b, num_tiles, c, h, w = pixel_values.shape
    stacked = pixel_values.reshape(b * num_tiles, c, h, w)
    feats = clip_vision_tower(params, stacked)                   # (b*tiles, NTOK, DV)
    feats = feats[:, 1:, :]                                      # select strategy 'default'
    proj = multi_modal_projector(params, feats)                  # (b*tiles, 16, DT)
    patch_embeds = proj.reshape(b, num_tiles, GRID * GRID, DT)
    vision_embeddings = [
        merge_image_patch_embeddings(image_sizes[i], patch_embeds[i],
                                     params["image_newline"])
        for i in range(b)
    ]
    inputs_embeds = params["embed"][input_ids]
    inputs_embeds = merge_multimodal_embeddings(input_ids, inputs_embeds,
                                                vision_embeddings,
                                                IMAGE_TOKEN_INDEX)
    return language_model_forward(params, inputs_embeds, positions)


# ----------------------------------------------------------------------------
# Deterministic parameter init (shapes implied by the module __init__); bf16 storage
# ----------------------------------------------------------------------------
def init_params(key):
    std = 0.02
    keys = iter(jax.random.split(key, 256))

    def nrm(shape):
        return (std * jax.random.normal(next(keys), shape, dtype=jnp.float32)
                ).astype(COMPUTE_DTYPE)

    def ones(shape):
        return jnp.ones(shape, COMPUTE_DTYPE)

    def zeros(shape):
        return jnp.zeros(shape, COMPUTE_DTYPE)

    p = {}
    # CLIP-style vision tower (weights stored (in, out); semantics match nn.Linear)
    p["patch_w"] = nrm((3 * PATCH * PATCH, DV))
    p["patch_b"] = zeros((DV,))
    p["cls"] = nrm((DV,))
    p["pos_emb"] = nrm((NTOK, DV))
    p["pre_ln_g"] = ones((DV,))
    p["pre_ln_b"] = zeros((DV,))
    p["vision_layers"] = [
        dict(ln1_g=ones((DV,)), ln1_b=zeros((DV,)),
             qkv_w=nrm((DV, 3 * DV)), qkv_b=zeros((3 * DV,)),
             o_w=nrm((DV, DV)), o_b=zeros((DV,)),
             ln2_g=ones((DV,)), ln2_b=zeros((DV,)),
             fc1_w=nrm((DV, FFN_V)), fc1_b=zeros((FFN_V,)),
             fc2_w=nrm((FFN_V, DV)), fc2_b=zeros((DV,)))
        for _ in range(N_VISION_LAYERS)
    ]
    # LlavaMultiModalProjector
    p["proj_l1_w"] = nrm((DV, DT))
    p["proj_l1_b"] = zeros((DT,))
    p["proj_l2_w"] = nrm((DT, DT))
    p["proj_l2_b"] = zeros((DT,))
    # image_newline parameter (text hidden size)
    p["image_newline"] = nrm((DT,))
    # language model (LLaMA-style: no QKV / o_proj biases)
    p["embed"] = nrm((VOCAB, DT))
    p["text_layers"] = [
        dict(ln1_g=ones((DT,)),
             qkv_w=nrm((DT, 3 * DT)),
             o_w=nrm((DT, DT)),
             ln2_g=ones((DT,)),
             gate_w=nrm((DT, FFN_T)), up_w=nrm((DT, FFN_T)), down_w=nrm((FFN_T, DT)))
        for _ in range(N_TEXT_LAYERS)
    ]
    p["final_norm_g"] = ones((DT,))
    return p


# ----------------------------------------------------------------------------
if __name__ == "__main__":
    key = jax.random.PRNGKey(0)
    pkey, xkey = jax.random.split(key)
    params = init_params(pkey)

    # One image, anyres 2x2 grid -> 1 base tile + 4 patch tiles.
    pixel_values = jax.random.normal(xkey, (1, 5, 3, IMG, IMG), dtype=jnp.float32)
    image_sizes = [[24, 32]]  # (height, width) -- exercises the unpad (crop-rows) path

    n_image_tokens = get_llava_next_image_feature_size(24, 32)
    assert n_image_tokens == 70  # 48 unpadded + 6 newline + 16 base

    prefix = jnp.array([1, 5, 9, 17, 21], dtype=jnp.int32)
    image_toks = jnp.full((n_image_tokens,), IMAGE_TOKEN_INDEX, dtype=jnp.int32)
    suffix = jnp.array([40, 41, 42, 43, 44, 2], dtype=jnp.int32)
    input_ids = jnp.concatenate([prefix, image_toks, suffix])          # (81,)
    positions = jnp.arange(input_ids.shape[0], dtype=jnp.int32)

    hidden_states = llava_next_forward(params, input_ids, positions,
                                       pixel_values, image_sizes)
    hidden_states = jax.block_until_ready(hidden_states)

    assert hidden_states.shape == (int(input_ids.shape[0]), DT)
    assert bool(jnp.all(jnp.isfinite(hidden_states.astype(jnp.float32))))
    print("KERNEL_OK")
</pallas_src>

<mosaic_0001>
module attributes {stable_mosaic.version = 11 : i64} {
  func.func @kernel(%arg0: i32, %arg1: i32, %arg2: i32, %arg3: memref<1x16x48xbf16, #tpu.memory_space<vmem>>, %arg4: memref<48x128xbf16, #tpu.memory_space<vmem>>, %arg5: memref<1x128xbf16, #tpu.memory_space<vmem>>, %arg6: memref<1x16x128xbf16, #tpu.memory_space<vmem>>) attributes {dimension_semantics = [#tpu.dimension_semantics<parallel>, #tpu.dimension_semantics<parallel>, #tpu.dimension_semantics<parallel>], iteration_bounds = array<i64: 5, 1, 1>, scalar_prefetch = 0 : i64, scratch_operands = 0 : i64, tpu.core_type = #tpu.core_type<tc>, window_params = [{transform_indices = @transform_0, window_bounds = array<i64: 1, 16, 48>}, {transform_indices = @transform_1, window_bounds = array<i64: 48, 128>}, {transform_indices = @transform_2, window_bounds = array<i64: 1, 128>}, {transform_indices = @transform_3, window_bounds = array<i64: 1, 16, 128>}]} {
    %c0 = arith.constant 0 : index
    %c0_0 = arith.constant 0 : index
    %c0_1 = arith.constant 0 : index
    %0 = vector.load %arg3[%c0, %c0_0, %c0_1] : memref<1x16x48xbf16, #tpu.memory_space<vmem>>, vector<1x16x48xbf16>
    %1 = vector.shape_cast %0 : vector<1x16x48xbf16> to vector<16x48xbf16>
    %2 = arith.extf %1 : vector<16x48xbf16> to vector<16x48xf32>
    %3 = arith.truncf %2 : vector<16x48xf32> to vector<16x48xbf16>
    %c0_2 = arith.constant 0 : index
    %c0_3 = arith.constant 0 : index
    %4 = vector.load %arg4[%c0_2, %c0_3] : memref<48x128xbf16, #tpu.memory_space<vmem>>, vector<48x128xbf16>
    %cst = arith.constant dense<0.000000e+00> : vector<16x128xf32>
    %5 = tpu.matmul %3, %4, %cst {dimension_numbers = #tpu.dot_dimension_numbers<[1], [0], [0], [1], [0, 0, 1, 1], [], []>} : vector<16x48xbf16>, vector<48x128xbf16>, vector<16x128xf32> -> vector<16x128xf32>
    %c0_4 = arith.constant 0 : index
    %c0_5 = arith.constant 0 : index
    %6 = vector.load %arg5[%c0_4, %c0_5] : memref<1x128xbf16, #tpu.memory_space<vmem>>, vector<1x128xbf16>
    %7 = arith.extf %6 : vector<1x128xbf16> to vector<1x128xf32>
    %8 = vector.broadcast %7 : vector<1x128xf32> to vector<16x128xf32>
    %9 = arith.addf %5, %8 : vector<16x128xf32>
    %10 = arith.truncf %9 : vector<16x128xf32> to vector<16x128xbf16>
    %c0_6 = arith.constant 0 : index
    %c0_7 = arith.constant 0 : index
    %c0_8 = arith.constant 0 : index
    %11 = vector.load %arg6[%c0_6, %c0_7, %c0_8] : memref<1x16x128xbf16, #tpu.memory_space<vmem>>, vector<1x16x128xbf16>
    %12 = vector.shape_cast %11 : vector<1x16x128xbf16> to vector<16x128xbf16>
    %13 = vector.shape_cast %10 : vector<16x128xbf16> to vector<1x16x128xbf16>
    tpu.vector_store %arg6[%c0_6, %c0_7, %c0_8], %13 {strides = array<i32>} : memref<1x16x128xbf16, #tpu.memory_space<vmem>>, vector<1x16x128xbf16>,
    return
  }
  func.func @transform_0(%arg0: i32, %arg1: i32, %arg2: i32) -> (i32, i32, i32) {
    %c0_i32 = arith.constant 0 : i32
    %c0_i32_0 = arith.constant 0 : i32
    return %arg0, %arg1, %c0_i32 : i32, i32, i32
  }
  func.func @transform_1(%arg0: i32, %arg1: i32, %arg2: i32) -> (i32, i32) {
    %c0_i32 = arith.constant 0 : i32
    %c0_i32_0 = arith.constant 0 : i32
    return %c0_i32, %arg2 : i32, i32
  }
  func.func @transform_2(%arg0: i32, %arg1: i32, %arg2: i32) -> (i32, i32) {
    %c0_i32 = arith.constant 0 : i32
    %c0_i32_0 = arith.constant 0 : i32
    return %c0_i32, %arg2 : i32, i32
  }
  func.func @transform_3(%arg0: i32, %arg1: i32, %arg2: i32) -> (i32, i32, i32) {
    %c0_i32 = arith.constant 0 : i32
    return %arg0, %arg1, %arg2 : i32, i32, i32
  }
}

</mosaic_0001>

<llo_original>
// kernel: tpu_custom_call.1
$region0: #{tpu_custom_call.1}
  #allocation0 [shape = 'u32[]', space=smem, size = 0x4, offset = 0x4, fixed_abs, tag = 'smem constant byte address 0x4 - core index']
  #allocation1 [shape = 'u32[144,128]{1,0:T(1,128)}', space=vmem, size = 0x12000, scoped, tag = 'internal scratch']
  %s0 = inlined_call_operand.hbm [shape: bf16[5,16,48], index: 0, kind: input, shape index: {}]
  %s1 = inlined_call_operand.hbm [shape: bf16[48,128], index: 1, kind: input, shape index: {}]
  %s2 = inlined_call_operand.vmem [shape: bf16[1,128], index: 2, kind: input, shape index: {}]
  %s3 = inlined_call_operand.hbm [shape: bf16[5,16,128], index: 3, kind: output, shape index: {}]
  %s4 = sld [smem:[#allocation0]]
  $region53: #{tpu_custom_call.1} parent=0
    _
  %s6 = ssub.s32 1, %s4
  %s7 = scalar_select 0, %s6, %s4
  $region1: #{tpu_custom_call.1} parent=0
    #allocation2 [shape = 'u8[8192]{0}', space=vmem, size = 0x2000, scoped, tag = 'input window, operand 0']
    #allocation3 [shape = 's32[2]{0}', space=sflag, size = 0x8, scoped, tag = 'scoped memory for tpu_custom_call.1']
    #allocation4 [shape = 's32[2]{0}', space=sflag, size = 0x8, scoped, tag = 'scoped memory for tpu_custom_call.1']
    #allocation5 [shape = 'u8[12288]{0}', space=vmem, size = 0x3000, scoped, tag = 'input window, operand 1, single buffered']
    #allocation6 [shape = 's32[1]{0}', space=sflag, size = 0x4, scoped, tag = 'scoped memory for tpu_custom_call.1']
    #allocation7 [shape = 'u8[8192]{0}', space=vmem, size = 0x2000, scoped, tag = 'output window, operand 0']
    %8 = vsyncpa [#allocation3], 0
    %s9 = scalar_lea.sflag [#allocation3], 1
    %10 = vsyncpa %s9, 0
    %11 = vsyncpa [#allocation6], 0
    %12 = vsyncpa [#allocation4], 0
    %s13 = scalar_lea.sflag [#allocation4], 1
    %14 = vsyncpa %s13, 0
    loop: start=0, step=1, limit=7
    $region2: #{tpu_custom_call.1} parent=1 // loop_pre_header
      _
    $region3: #{tpu_custom_call.1} parent=1 // loop_header
      %s16 = sphi 0, %s20
      %p17 = scmp.ge.s32.totalorder %s16, 7
      %s23 = sphi 0, %s42
      %s24 = sphi 0, %s38
      %s25 = sphi 0, %s34
      %s26 = sphi 0, %s23
      %s27 = sphi 0, %s24
      %s28 = sphi 0, %s25
      %s29 = sphi 0, %s26
      %s30 = sphi 0, %s27
      %s31 = sphi 0, %s28
      %s47 = sphi 0, %s49
      %s50 = sphi 0, %s47
      %s51 = sphi 0, %s50
      %s67 = sphi 0, %s51
      %s73 = sphi 0, %s75
      %s76 = sphi 0, %s73
      %s77 = sphi 0, %s76
      %s93 = sphi 0, %s77
      %s99 = sphi 0, %s101
      %s102 = sphi 0, %s99
      %s103 = sphi 0, %s102
      %s119 = sphi 0, %s103
      %s129 = sphi 0, %s131
      %s132 = sphi 0, %s129
      %s133 = sphi 0, %s132
      %s149 = sphi 0, %s133
    $region4: #{tpu_custom_call.1} parent=1 // loop_header_branch
      %19 = sbr.rel (%p17) target = $region8
    $region5: #{tpu_custom_call.1} parent=1 // loop_body
      %s21 = ssub.s32 %s16, 1
      %s22 = ssub.s32 %s16, 2
      %s32 = sadd.s32 1, %s25
      %p33 = scmp.ge.s32.totalorder %s32, 1
      %s34 = scalar_select %p33, 0, %s32
      %s35 = sadd.s32 1, %s24
      %s36 = scalar_select %p33, %s35, %s24
      %p37 = scmp.ge.s32.totalorder %s36, 1
      %s38 = scalar_select %p37, 0, %s36
      %s39 = sadd.s32 1, %s23
      %s40 = scalar_select %p37, %s39, %s23
      %p41 = scmp.ge.s32.totalorder %s40, 5
      %s42 = scalar_select %p41, 0, %s40
      %s43 = ssub.s32 %s23, %s42
      %s44 = ssub.s32 %s24, %s38
      %s45 = sor.u32 %s43, %s44
      %p46 = scmp.eq.s32.totalorder %s45, 0
      %s48 = sadd.s32 %s47, 1
      %s49 = scalar_select %p46, %s47, %s48
      %p52 = pneg %p46
      %p53 = scmp.eq.s32.totalorder %s16, 4
      %p54 = por %p52, %p53
      %p55 = scmp.ne.s32.totalorder %s47, %s50
      %p56 = scmp.eq.s32.totalorder %s16, 0
      %p57 = por %p55, %p56
      %p58 = scmp.ne.s32.totalorder %s47, %s50
      %p59 = scmp.eq.s32.totalorder %s21, 4
      %p60 = por %p58, %p59
      %p61 = scmp.ne.s32.totalorder %s50, %s51
      %p62 = scmp.eq.s32.totalorder %s21, 0
      %p63 = por %p61, %p62
      %p64 = scmp.ne.s32.totalorder %s50, %s51
      %p65 = scmp.eq.s32.totalorder %s22, 4
      %p66 = por %p64, %p65
      %p68 = scmp.ne.s32.totalorder %s51, %s67
      %p69 = scmp.eq.s32.totalorder %s22, 0
      %p70 = por %p68, %p69
      %s71 = ssub.s32 %s25, %s34
      %p72 = scmp.eq.s32.totalorder %s71, 0
      %s74 = sadd.s32 %s73, 1
      %s75 = scalar_select %p72, %s73, %s74
      %p78 = pneg %p72
      %p79 = scmp.eq.s32.totalorder %s16, 4
      %p80 = por %p78, %p79
      %p81 = scmp.ne.s32.totalorder %s73, %s76
      %p82 = scmp.eq.s32.totalorder %s16, 0
      %p83 = por %p81, %p82
      %p84 = scmp.ne.s32.totalorder %s73, %s76
      %p85 = scmp.eq.s32.totalorder %s21, 4
      %p86 = por %p84, %p85
      %p87 = scmp.ne.s32.totalorder %s76, %s77
      %p88 = scmp.eq.s32.totalorder %s21, 0
      %p89 = por %p87, %p88
      %p90 = scmp.ne.s32.totalorder %s76, %s77
      %p91 = scmp.eq.s32.totalorder %s22, 4
      %p92 = por %p90, %p91
      %p94 = scmp.ne.s32.totalorder %s77, %s93
      %p95 = scmp.eq.s32.totalorder %s22, 0
      %p96 = por %p94, %p95
      %s97 = ssub.s32 %s25, %s34
      %p98 = scmp.eq.s32.totalorder %s97, 0
      %s100 = sadd.s32 %s99, 1
      %s101 = scalar_select %p98, %s99, %s100
      %p104 = pneg %p98
      %p105 = scmp.eq.s32.totalorder %s16, 4
      %p106 = por %p104, %p105
      %p107 = scmp.ne.s32.totalorder %s99, %s102
      %p108 = scmp.eq.s32.totalorder %s16, 0
      %p109 = por %p107, %p108
      %p110 = scmp.ne.s32.totalorder %s99, %s102
      %p111 = scmp.eq.s32.totalorder %s21, 4
      %p112 = por %p110, %p111
      %p113 = scmp.ne.s32.totalorder %s102, %s103
      %p114 = scmp.eq.s32.totalorder %s21, 0
      %p115 = por %p113, %p114
      %p116 = scmp.ne.s32.totalorder %s102, %s103
      %p117 = scmp.eq.s32.totalorder %s22, 4
      %p118 = por %p116, %p117
      %p120 = scmp.ne.s32.totalorder %s103, %s119
      %p121 = scmp.eq.s32.totalorder %s22, 0
      %p122 = por %p120, %p121
      %s123 = ssub.s32 %s23, %s42
      %s124 = ssub.s32 %s24, %s38
      %s125 = sor.u32 %s123, %s124
      %s126 = ssub.s32 %s25, %s34
      %s127 = sor.u32 %s125, %s126
      %p128 = scmp.eq.s32.totalorder %s127, 0
      %s130 = sadd.s32 %s129, 1
      %s131 = scalar_select %p128, %s129, %s130
      %p134 = pneg %p128
      %p135 = scmp.eq.s32.totalorder %s16, 4
      %p136 = por %p134, %p135
      %p137 = scmp.ne.s32.totalorder %s129, %s132
      %p138 = scmp.eq.s32.totalorder %s16, 0
      %p139 = por %p137, %p138
      %p140 = scmp.ne.s32.totalorder %s129, %s132
      %p141 = scmp.eq.s32.totalorder %s21, 4
      %p142 = por %p140, %p141
      %p143 = scmp.ne.s32.totalorder %s132, %s133
      %p144 = scmp.eq.s32.totalorder %s21, 0
      %p145 = por %p143, %p144
      %p146 = scmp.ne.s32.totalorder %s132, %s133
      %p147 = scmp.eq.s32.totalorder %s22, 4
      %p148 = por %p146, %p147
      %p150 = scmp.ne.s32.totalorder %s133, %s149
      %p151 = scmp.eq.s32.totalorder %s22, 0
      %p152 = por %p150, %p151
      %p153 = scmp.le.s32.totalorder 1, %s16
      %p154 = scmp.lt.s32.totalorder %s16, 6
      %p155 = pnand %p153, %p154
      %p156 = pneg %p155
      // Predicated region
      $region9: #{tpu_custom_call.1} parent=5 // pred_check
        _
      $region10: #{tpu_custom_call.1} parent=5 // pred_check_branch
        %158 = sbr.rel (%p155) target = $region12
      $region11: #{tpu_custom_call.1} parent=5 // pred_region
        %s159 = ssub.s32 %s16, 1
        // Predicated region
        $region13: #{tpu_custom_call.1} parent=11 // pred_check
          %p160 = pneg %p89
        $region14: #{tpu_custom_call.1} parent=11 // pred_check_branch
          %162 = sbr.rel (%p160) target = $region16
        $region15: #{tpu_custom_call.1} parent=11 // pred_region
          %s164 = ssub.s32 384, 384
          %165 = vsyncadd [#allocation6], %s164
          %s166 = smul.addr %s28, 64
          %s167 = scalar_lea.hbm %s1, %s166
          %s168 = sshll.u32 [#allocation5], 4
          %s169 = int_to_ptr.vmem [resolvable:$true] %s168
          %174 = dma.hbm_to_vmem [thread:$0]  %s167, 384, %s169, [#allocation6], 64, 64, 4
        $region16: #{tpu_custom_call.1} parent=11 // pred_fallthru
          _
        // Predicated region
        $region17: #{tpu_custom_call.1} parent=11 // pred_check
          %p175 = pneg %p115
        $region18: #{tpu_custom_call.1} parent=11 // pred_check_branch
          %177 = sbr.rel (%p175) target = $region20
        $region19: #{tpu_custom_call.1} parent=11 // pred_region
          %p178 = scmp.lt.s32.totalorder %s28, 0
          %s179 = scalar_select %p178, %s28, 0
          %s180 = scalar_lea.vmem %s2, %s179
        $region20: #{tpu_custom_call.1} parent=11 // pred_fallthru
          _
      $region12: #{tpu_custom_call.1} parent=5 // pred_fallthru
        _
      %p181 = scmp.lt.s32.totalorder %s16, 5
      // Predicated region
      $region21: #{tpu_custom_call.1} parent=5 // pred_check
        %p182 = pneg %p181
      $region22: #{tpu_custom_call.1} parent=5 // pred_check_branch
        %184 = sbr.rel (%p182) target = $region24
      $region23: #{tpu_custom_call.1} parent=5 // pred_region
        // Predicated region
        $region25: #{tpu_custom_call.1} parent=23 // pred_check
          %p185 = pneg %p57
        $region26: #{tpu_custom_call.1} parent=23 // pred_check_branch
          %187 = sbr.rel (%p185) target = $region28
        $region27: #{tpu_custom_call.1} parent=23 // pred_region
          %s188 = sand.u32 %s47, 1
          %s189 = scalar_lea.sflag [#allocation3], %s188
          %s190 = sand.u32 %s47, 1
          %s191 = smul.addr %s190, 8
          %s192 = scalar_lea.vmem [#allocation2], %s191
          %s193 = smul.u32 2, %s24
          %s195 = ssub.s32 128, 128
          %196 = vsyncadd %s189, %s195
          %s197 = smul.addr %s23, 2
          %s198 = sadd.s32 %s193, %s197
          %s199 = smul.addr %s198, 64
          %s200 = scalar_lea.hbm %s0, %s199
          %s201 = sshll.u32 %s192, 4
          %s202 = int_to_ptr.vmem [resolvable:$true] %s201
          %207 = dma.hbm_to_vmem [thread:$0]  %s200, 128, %s202, %s189, 64, 64, 4
        $region28: #{tpu_custom_call.1} parent=23 // pred_fallthru
          _
      $region24: #{tpu_custom_call.1} parent=5 // pred_fallthru
        _
      %p208 = scmp.le.s32.totalorder 1, %s16
      %p209 = scmp.lt.s32.totalorder %s16, 6
      %p210 = pnand %p208, %p209
      %p211 = pneg %p210
      // Predicated region
      $region29: #{tpu_custom_call.1} parent=5 // pred_check
        _
      $region30: #{tpu_custom_call.1} parent=5 // pred_check_branch
        %213 = sbr.rel (%p210) target = $region32
      $region31: #{tpu_custom_call.1} parent=5 // pred_region
        %s214 = ssub.s32 %s16, 1
        %s215 = sand.u32 %s50, 1
        %s216 = scalar_lea.sflag [#allocation3], %s215
        %s217 = sand.u32 %s50, 1
        %s218 = smul.addr %s217, 8
        %s219 = scalar_lea.vmem [#allocation2], %s218
        // Predicated region
        $region33: #{tpu_custom_call.1} parent=31 // pred_check
          %p220 = pneg %p63
        $region34: #{tpu_custom_call.1} parent=31 // pred_check_branch
          %222 = sbr.rel (%p220) target = $region36
        $region35: #{tpu_custom_call.1} parent=31 // pred_region
          %223 = dma.done %s216, 128
        $region36: #{tpu_custom_call.1} parent=31 // pred_fallthru
          _
        // Predicated region
        $region37: #{tpu_custom_call.1} parent=31 // pred_check
          %p224 = pneg %p89
        $region38: #{tpu_custom_call.1} parent=31 // pred_check_branch
          %226 = sbr.rel (%p224) target = $region40
        $region39: #{tpu_custom_call.1} parent=31 // pred_region
          %227 = dma.done [#allocation6], 384
        $region40: #{tpu_custom_call.1} parent=31 // pred_fallthru
          _
        %s228 = sand.u32 %s50, 1
        %s229 = scalar_lea.sflag [#allocation3], %s228
        %s230 = sand.u32 %s50, 1
        %s231 = smul.addr %s230, 8
        %s232 = scalar_lea.vmem [#allocation2], %s231
        %p233 = pneg %p63
        %p234 = pneg %p60
        %p235 = pneg %p89
        %p236 = pneg %p86
        %p237 = scmp.lt.s32.totalorder %s28, 0
        %s238 = scalar_select %p237, %s28, 0
        %s239 = scalar_lea.vmem %s2, %s238
        %p240 = pneg %p115
        %p241 = pneg %p112
        %p242 = pneg %p145
        %p243 = pneg %p142
        %s244 = sand.u32 %s132, 1
        %s245 = scalar_lea.sflag [#allocation4], %s244
        %s246 = sand.u32 %s132, 1
        %s247 = smul.addr %s246, 8
        %s248 = scalar_lea.vmem [#allocation7], %s247
        %s249 = smul.u32 2, %s27
        %p250 = scmp.lt.s32.totalorder %s28, 0
        %s251 = scalar_select %p250, %s28, 0
        %s252 = scalar_lea.vmem %s2, %s251
        %s253 = smul.u32 2, %s27
        %v255 = vld [vmem:[%s219] sm:$0xf]
        %v256 = vld [vmem:[%s219 + $0x4] sm:$0xf]
        %v257 = vld [vmem:[#allocation5] sm:$0xf]
        %v258 = vld [vmem:[#allocation5 + $0x4] sm:$0xf]
        %v259 = vld [vmem:[#allocation5 + $0x8] sm:$0xf]
        %v260 = vld [vmem:[#allocation5 + $0xc] sm:$0xf]
        %v261 = vld [vmem:[#allocation5 + $0x10] sm:$0xf]
        %v262 = vld [vmem:[#allocation5 + $0x14] sm:$0xf]
        %v263 = vld [vmem:[%s252] sm:$0x1]
        %v264 = vunpack.c.l.bf16 %v263
        %v265 = vlaneseq
        %v266 = vshrl.u32 %v265, 7
        %v267 = vsub.s32 0, %v266
        %v268 = vrot.slane %v264, %v267
        %v271 = vunpack.c.l.b16 %v255
        %v272 = vunpack.c.l.b16 %v256
        %v273 = vpack.c.b16 %v272, %v271
        %v280 = vunpack.c.l.b16 %v257
        %v281 = vunpack.c.l.b16 %v258
        %v282 = vunpack.c.l.b16 %v259
        %v283 = vunpack.c.l.b16 %v260
        %v284 = vunpack.c.l.b16 %v261
        %v285 = vunpack.c.l.b16 %v262
        %v286 = vpack.c.b16 %v281, %v280
        %v287 = vpack.c.b16 %v283, %v282
        %v288 = vpack.c.b16 %v285, %v284
        %vm292 = vcmask 392192
        %v294 = vsel %vm292, %v273, 0
        %296 = vmatprep.subr.bf16.mxu0 0
        %297 = vmatpush1.bf16.msra.mxu0 %v286
        %298 = vmatprep.subr.bf16.mxu0 0
        %299 = vmatpush1.bf16.msra.mxu0 %v287
        %300 = vmatprep.subr.bf16.mxu0 0
        %301 = vmatpush1.bf16.msra.mxu0 %v288
        %302 = vmatprep.subr.bf16.mxu0 0
        %303 = vmatpush1.bf16.msra.mxu0 0
        %304 = vmatprep.subr.bf16.mxu0 0
        %305 = vmatpush1.bf16.msra.mxu0 0
        %306 = vmatprep.subr.bf16.mxu0 0
        %307 = vmatpush1.bf16.msra.mxu0 0
        %308 = vmatprep.subr.bf16.mxu0 0
        %309 = vmatpush1.bf16.msra.mxu0 0
        %310 = vmatprep.subr.bf16.mxu0 0
        %311 = vmatpush1.bf16.msra.mxu0 0
        %312 = vmatprep.subr.bf16.mxu0 0
        %313 = vmatpush1.bf16.msra.mxu0 0
        %314 = vmatprep.subr.bf16.mxu0 0
        %315 = vmatpush1.bf16.msra.mxu0 0
        %316 = vmatprep.subr.bf16.mxu0 0
        %317 = vmatpush1.bf16.msra.mxu0 0
        %318 = vmatprep.subr.bf16.mxu0 0
        %319 = vmatpush1.bf16.msra.mxu0 0
        %320 = vmatprep.subr.bf16.mxu0 0
        %321 = vmatpush1.bf16.msra.mxu0 0
        %322 = vmatprep.subr.bf16.mxu0 0
        %323 = vmatpush1.bf16.msra.mxu0 0
        %324 = vmatprep.subr.bf16.mxu0 0
        %325 = vmatpush1.bf16.msra.mxu0 0
        %326 = vmatprep.subr.bf16.mxu0 0
        %327 = vmatpush1.bf16.msra.mxu0 0
        %328 = vmatprep.mubr.bf16.mxu0 0
        %329 = vmatmul.mubr.bf16.gmra.mrb[0].mxu0 %v294
        %v330 = vpop.f32.mrb[0].mxu0
        %v331 = vadd.f32 %v268, %v330
        %v332 = vpop.f32.mrb[0].mxu0
        %v333 = vpop.f32.mrb[0].mxu0
        %v334 = vadd.f32 %v268, %v333
        %v335 = vpop.f32.mrb[0].mxu0
        %336 = vdwg.mxu0
        %v337 = vpack.c.bf16 %v334, %v331
        %v339 = vunpack.c.l.b16 %v337
        %v340 = vunpack.c.h.b16 %v337
        %v341 = vpack.c.b16 %v339, %v339
        %v342 = vpack.c.b16 %v340, %v340
        %345 = vst [vmem:[%s248] sm:$0xf] %v341
        %346 = vst [vmem:[%s248 + $0x4] sm:$0xf] %v342
        %s347 = sand.u32 %s132, 1
        %s348 = scalar_lea.sflag [#allocation4], %s347
        %s349 = sand.u32 %s132, 1
        %s350 = smul.addr %s349, 8
        %s351 = scalar_lea.vmem [#allocation7], %s350
        // Predicated region
        $region41: #{tpu_custom_call.1} parent=31 // pred_check
          %p352 = pneg %p142
        $region42: #{tpu_custom_call.1} parent=31 // pred_check_branch
          %354 = sbr.rel (%p352) target = $region44
        $region43: #{tpu_custom_call.1} parent=31 // pred_region
          %s355 = smul.u32 2, %s27
          %s357 = ssub.s32 128, 128
          %358 = vsyncadd %s348, %s357
          %s359 = sadd.s32 %s28, %s355
          %s360 = smul.addr %s26, 2
          %s361 = sadd.s32 %s359, %s360
          %s362 = smul.addr %s361, 64
          %s363 = scalar_lea.hbm %s3, %s362
          %s364 = sshll.u32 %s351, 4
          %s365 = int_to_ptr.vmem [resolvable:$true] %s364
          %370 = dma.vmem_to_hbm [thread:$0]  %s365, 128, %s363, %s348, 64, 64, 4
        $region44: #{tpu_custom_call.1} parent=31 // pred_fallthru
          _
      $region32: #{tpu_custom_call.1} parent=5 // pred_fallthru
        _
      %p371 = scmp.le.s32.totalorder 2, %s16
      // Predicated region
      $region45: #{tpu_custom_call.1} parent=5 // pred_check
        %p372 = pneg %p371
      $region46: #{tpu_custom_call.1} parent=5 // pred_check_branch
        %374 = sbr.rel (%p372) target = $region48
      $region47: #{tpu_custom_call.1} parent=5 // pred_region
        %s375 = ssub.s32 %s16, 2
        // Predicated region
        $region49: #{tpu_custom_call.1} parent=47 // pred_check
          %p376 = pneg %p148
        $region50: #{tpu_custom_call.1} parent=47 // pred_check_branch
          %378 = sbr.rel (%p376) target = $region52
        $region51: #{tpu_custom_call.1} parent=47 // pred_region
          %s379 = sand.u32 %s133, 1
          %s380 = scalar_lea.sflag [#allocation4], %s379
          %s381 = sand.u32 %s133, 1
          %s382 = smul.addr %s381, 8
          %s383 = scalar_lea.vmem [#allocation7], %s382
          %384 = dma.done %s380, 128
        $region52: #{tpu_custom_call.1} parent=47 // pred_fallthru
          _
      $region48: #{tpu_custom_call.1} parent=5 // pred_fallthru
        _
    $region6: #{tpu_custom_call.1} parent=1 // loop_footer
      %s20 = sadd.s32 1, %s16
    $region7: #{tpu_custom_call.1} parent=1 // loop_footer_branch
      %15 = sbr.rel target = $region3
    $region8: #{tpu_custom_call.1} parent=1 // loop_exit
      _
    %385 = vsyncpa [#allocation3], 1
    %s386 = scalar_lea.sflag [#allocation3], 1
    %387 = vsyncpa %s386, 1
    %388 = vsyncpa [#allocation6], 1
    %389 = vsyncpa [#allocation4], 1
    %s390 = scalar_lea.sflag [#allocation4], 1
    %391 = vsyncpa %s390, 1

</llo_original>
